<compile_context>
chip_gen: v7x
topology: tpu7x:2x2x1
jax: 0.10.0
libtpu: 0.0.40
codegen_flags: <defaults>
</compile_context>

<pallas_src>
import jax
import jax.numpy as jnp
from jax.experimental import pallas as pl
from jax.experimental.pallas import tpu as pltpu

D_IN = 2
D_OUT = 3


def _linear_permute_kernel_u32(x_ref, w_ref, b_ref, o_ref):
    # x_ref: (1, 1, TILE_S) uint32 VMEM -- two packed bf16 features per lane.
    # w_ref: (D_OUT, D_IN)  SMEM f32 (scalar reads)
    # b_ref: (D_OUT,)       SMEM f32 (scalar reads)
    # o_ref: (1, D_OUT, TILE_S) f32 VMEM -- already in permuted (B, 3, S) order
    u = x_ref[0]                                                    # (1, TILE_S) uint32
    # bf16 -> f32 is exact when the 16 bits land in the top half of the word.
    x0 = pltpu.bitcast(u << 16, jnp.float32)                        # feature 0 (low 16 bits)
    x1 = pltpu.bitcast(u & jnp.uint32(0xFFFF0000), jnp.float32)     # feature 1 (high 16 bits)
    for n in range(D_OUT):
        row = w_ref[n, 0] * x0 + w_ref[n, 1] * x1 + b_ref[n]        # (1, TILE_S) f32, VPU only
        o_ref[0, n:n + 1, :] = row.astype(o_ref.dtype)


def _linear_permute_kernel_f32(x_ref, w_ref, b_ref, o_ref):
    # Fallback path: x_ref: (1, D_IN, TILE_S) f32 (seq on lanes).
    x = x_ref[0].astype(jnp.float32)                                # (D_IN, TILE_S)
    x0 = x[0:1, :]
    x1 = x[1:2, :]
    for n in range(D_OUT):
        row = w_ref[n, 0] * x0 + w_ref[n, 1] * x1 + b_ref[n]
        o_ref[0, n:n + 1, :] = row.astype(o_ref.dtype)


def linear_model_forward(x, weight, bias, *, tile_s=8192):
    """LinearModel.forward: cast to f32, nn.Linear(2, 3), permute(0, 2, 1).

    x: (B, S, 2) float dtype; weight: (3, 2); bias: (3,).  Returns (B, 3, S) f32.
    """
    B, S, d_in = x.shape
    assert d_in == D_IN
    weight = weight.astype(jnp.float32)
    bias = bias.astype(jnp.float32)

    # Tile selection: lane-dense (multiple of 128), capped at tile_s, and chosen
    # so the padded sequence length sp = ts * nb wastes < 128 * nb elements.
    ts_cap = max(128, (tile_s // 128) * 128)
    nb = pl.cdiv(S, ts_cap)                      # number of sequence blocks
    ts = 128 * pl.cdiv(pl.cdiv(S, 128), nb)      # balanced, multiple of 128
    sp = ts * nb                                 # padded sequence length

    grid = (B, nb)
    out_shape = jax.ShapeDtypeStruct((B, D_OUT, sp), jnp.float32)
    out_spec = pl.BlockSpec((1, D_OUT, ts), lambda b, s: (b, 0, s))
    smem_spec = pl.BlockSpec(memory_space=pltpu.MemorySpace.SMEM)
    cparams = pltpu.CompilerParams(
        dimension_semantics=("parallel", "parallel"))

    if x.dtype == jnp.bfloat16:
        # Reinterpret the two bf16 features of each token as one uint32 lane:
        # no transpose pass, lane-dense DMA of exactly 4 B/token.
        xu = jax.lax.bitcast_convert_type(x, jnp.uint32)            # (B, S)
        if sp != S:
            xu = jnp.pad(xu, ((0, 0), (0, sp - S)))
        xu = xu.reshape(B, 1, sp)
        out = pl.pallas_call(
            _linear_permute_kernel_u32,
            out_shape=out_shape,
            grid_spec=pltpu.PrefetchScalarGridSpec(
                num_scalar_prefetch=0,
                grid=grid,
                in_specs=[
                    pl.BlockSpec((1, 1, ts), lambda b, s: (b, 0, s)),
                    smem_spec,   # weight (3, 2)
                    smem_spec,   # bias (3,)
                ],
                out_specs=out_spec,
            ),
            compiler_params=cparams,
        )(xu, weight, bias)
    else:
        # Non-bf16 (e.g. f32) fallback: one wrapper transpose so the sequence
        # axis is on lanes; kernel math identical.
        x_t = jnp.transpose(x.astype(jnp.float32), (0, 2, 1))       # (B, 2, S)
        if sp != S:
            x_t = jnp.pad(x_t, ((0, 0), (0, 0), (0, sp - S)))
        out = pl.pallas_call(
            _linear_permute_kernel_f32,
            out_shape=out_shape,
            grid_spec=pltpu.PrefetchScalarGridSpec(
                num_scalar_prefetch=0,
                grid=grid,
                in_specs=[
                    pl.BlockSpec((1, D_IN, ts), lambda b, s: (b, 0, s)),
                    smem_spec,
                    smem_spec,
                ],
                out_specs=out_spec,
            ),
            compiler_params=cparams,
        )(x_t, weight, bias)

    if sp != S:
        out = out[:, :, :S]
    return out


if __name__ == "__main__":
    key = jax.random.PRNGKey(0)
    kx, kw, kb = jax.random.split(key, 3)

    # Deterministic parameters mimicking nn.Linear's uniform(-1/sqrt(fan_in), ...)
    bound = 1.0 / (D_IN ** 0.5)
    weight = jax.random.uniform(kw, (D_OUT, D_IN), jnp.float32, -bound, bound)
    bias = jax.random.uniform(kb, (D_OUT,), jnp.float32, -bound, bound)

    # --- main path: bf16 input (exercises the u32 de-interleave kernel) ---
    B, S = 2, 1024
    x = jax.random.normal(kx, (B, S, D_IN), dtype=jnp.bfloat16)
    out = jax.block_until_ready(linear_model_forward(x, weight, bias))

    xf = x.astype(jnp.float32)
    ref = jnp.transpose(xf @ weight.T + bias, (0, 2, 1))
    assert out.shape == (B, D_OUT, S), out.shape
    assert jnp.allclose(out, ref, atol=1e-5, rtol=1e-5), "mismatch vs reference (bf16 path)"

    # --- fallback path: f32 input with non-128-aligned S (exercises padding) ---
    S2 = 1000
    x2 = jax.random.normal(kx, (B, S2, D_IN), dtype=jnp.float32)
    out2 = jax.block_until_ready(linear_model_forward(x2, weight, bias))
    ref2 = jnp.transpose(x2 @ weight.T + bias, (0, 2, 1))
    assert out2.shape == (B, D_OUT, S2), out2.shape
    assert jnp.allclose(out2, ref2, atol=1e-5, rtol=1e-5), "mismatch vs reference (f32 path)"

    print("KERNEL_OK")
</pallas_src>

<mosaic_0001>
module attributes {stable_mosaic.version = 11 : i64} {
  func.func @_linear_permute_kernel_u32(%arg0: i32, %arg1: i32, %arg2: memref<1x1x1024xi32, #tpu.memory_space<vmem>>, %arg3: memref<3x2xf32, #tpu.memory_space<smem>>, %arg4: memref<3xf32, #tpu.memory_space<smem>>, %arg5: memref<1x3x1024xf32, #tpu.memory_space<vmem>>) attributes {dimension_semantics = [#tpu.dimension_semantics<parallel>, #tpu.dimension_semantics<parallel>], iteration_bounds = array<i64: 2, 1>, scalar_prefetch = 0 : i64, scratch_operands = 0 : i64, tpu.core_type = #tpu.core_type<tc>, window_params = [{transform_indices = @transform_0, window_bounds = array<i64: 1, 1, 1024>}, {transform_indices = @transform_1, window_bounds = array<i64: 3, 2>}, {transform_indices = @transform_2, window_bounds = array<i64: 3>}, {transform_indices = @transform_3, window_bounds = array<i64: 1, 3, 1024>}]} {
    %c0 = arith.constant 0 : index
    %c0_0 = arith.constant 0 : index
    %c0_1 = arith.constant 0 : index
    %0 = vector.load %arg2[%c0, %c0_0, %c0_1] : memref<1x1x1024xi32, #tpu.memory_space<vmem>>, vector<1x1x1024xi32>
    %1 = vector.shape_cast %0 : vector<1x1x1024xi32> to vector<1x1024xi32>
    %c16_i32 = arith.constant 16 : i32
    %2 = vector.broadcast %c16_i32 : i32 to vector<1x1024xi32>
    %3 = arith.shli %1, %2 : vector<1x1024xi32>
    %4 = tpu.bitcast %3 : vector<1x1024xi32> -> vector<1x1024xf32>
    %c-65536_i32 = arith.constant -65536 : i32
    %5 = vector.broadcast %c-65536_i32 : i32 to vector<1x1024xi32>
    %6 = arith.andi %1, %5 : vector<1x1024xi32>
    %7 = tpu.bitcast %6 : vector<1x1024xi32> -> vector<1x1024xf32>
    %c0_2 = arith.constant 0 : index
    %c0_3 = arith.constant 0 : index
    %8 = memref.load %arg3[%c0_2, %c0_3] : memref<3x2xf32, #tpu.memory_space<smem>>
    %9 = vector.broadcast %8 : f32 to vector<1x1024xf32>
    %10 = arith.mulf %9, %4 : vector<1x1024xf32>
    %c0_4 = arith.constant 0 : index
    %c1 = arith.constant 1 : index
    %11 = memref.load %arg3[%c0_4, %c1] : memref<3x2xf32, #tpu.memory_space<smem>>
    %12 = vector.broadcast %11 : f32 to vector<1x1024xf32>
    %13 = arith.mulf %12, %7 : vector<1x1024xf32>
    %14 = arith.addf %10, %13 : vector<1x1024xf32>
    %c0_5 = arith.constant 0 : index
    %15 = memref.load %arg4[%c0_5] : memref<3xf32, #tpu.memory_space<smem>>
    %16 = vector.broadcast %15 : f32 to vector<1x1024xf32>
    %17 = arith.addf %14, %16 : vector<1x1024xf32>
    %c0_6 = arith.constant 0 : index
    %c0_7 = arith.constant 0 : index
    %c0_8 = arith.constant 0 : index
    %18 = vector.load %arg5[%c0_6, %c0_7, %c0_8] : memref<1x3x1024xf32, #tpu.memory_space<vmem>>, vector<1x1x1024xf32>
    %19 = vector.shape_cast %18 : vector<1x1x1024xf32> to vector<1x1024xf32>
    %20 = vector.shape_cast %17 : vector<1x1024xf32> to vector<1x1x1024xf32>
    tpu.vector_store %arg5[%c0_6, %c0_7, %c0_8], %20 {strides = array<i32>} : memref<1x3x1024xf32, #tpu.memory_space<vmem>>, vector<1x1x1024xf32>,
    %c1_9 = arith.constant 1 : index
    %c0_10 = arith.constant 0 : index
    %21 = memref.load %arg3[%c1_9, %c0_10] : memref<3x2xf32, #tpu.memory_space<smem>>
    %22 = vector.broadcast %21 : f32 to vector<1x1024xf32>
    %23 = arith.mulf %22, %4 : vector<1x1024xf32>
    %c1_11 = arith.constant 1 : index
    %c1_12 = arith.constant 1 : index
    %24 = memref.load %arg3[%c1_11, %c1_12] : memref<3x2xf32, #tpu.memory_space<smem>>
    %25 = vector.broadcast %24 : f32 to vector<1x1024xf32>
    %26 = arith.mulf %25, %7 : vector<1x1024xf32>
    %27 = arith.addf %23, %26 : vector<1x1024xf32>
    %c1_13 = arith.constant 1 : index
    %28 = memref.load %arg4[%c1_13] : memref<3xf32, #tpu.memory_space<smem>>
    %29 = vector.broadcast %28 : f32 to vector<1x1024xf32>
    %30 = arith.addf %27, %29 : vector<1x1024xf32>
    %c0_14 = arith.constant 0 : index
    %c1_15 = arith.constant 1 : index
    %c0_16 = arith.constant 0 : index
    %31 = vector.load %arg5[%c0_14, %c1_15, %c0_16] : memref<1x3x1024xf32, #tpu.memory_space<vmem>>, vector<1x1x1024xf32>
    %32 = vector.shape_cast %31 : vector<1x1x1024xf32> to vector<1x1024xf32>
    %33 = vector.shape_cast %30 : vector<1x1024xf32> to vector<1x1x1024xf32>
    tpu.vector_store %arg5[%c0_14, %c1_15, %c0_16], %33 {strides = array<i32>} : memref<1x3x1024xf32, #tpu.memory_space<vmem>>, vector<1x1x1024xf32>,
    %c2 = arith.constant 2 : index
    %c0_17 = arith.constant 0 : index
    %34 = memref.load %arg3[%c2, %c0_17] : memref<3x2xf32, #tpu.memory_space<smem>>
    %35 = vector.broadcast %34 : f32 to vector<1x1024xf32>
    %36 = arith.mulf %35, %4 : vector<1x1024xf32>
    %c2_18 = arith.constant 2 : index
    %c1_19 = arith.constant 1 : index
    %37 = memref.load %arg3[%c2_18, %c1_19] : memref<3x2xf32, #tpu.memory_space<smem>>
    %38 = vector.broadcast %37 : f32 to vector<1x1024xf32>
    %39 = arith.mulf %38, %7 : vector<1x1024xf32>
    %40 = arith.addf %36, %39 : vector<1x1024xf32>
    %c2_20 = arith.constant 2 : index
    %41 = memref.load %arg4[%c2_20] : memref<3xf32, #tpu.memory_space<smem>>
    %42 = vector.broadcast %41 : f32 to vector<1x1024xf32>
    %43 = arith.addf %40, %42 : vector<1x1024xf32>
    %c0_21 = arith.constant 0 : index
    %c2_22 = arith.constant 2 : index
    %c0_23 = arith.constant 0 : index
    %44 = vector.load %arg5[%c0_21, %c2_22, %c0_23] : memref<1x3x1024xf32, #tpu.memory_space<vmem>>, vector<1x1x1024xf32>
    %45 = vector.shape_cast %44 : vector<1x1x1024xf32> to vector<1x1024xf32>
    %46 = vector.shape_cast %43 : vector<1x1024xf32> to vector<1x1x1024xf32>
    tpu.vector_store %arg5[%c0_21, %c2_22, %c0_23], %46 {strides = array<i32>} : memref<1x3x1024xf32, #tpu.memory_space<vmem>>, vector<1x1x1024xf32>,
    return
  }
  func.func @transform_0(%arg0: i32, %arg1: i32) -> (i32, i32, i32) {
    %c0_i32 = arith.constant 0 : i32
    %c0_i32_0 = arith.constant 0 : i32
    return %arg0, %c0_i32, %arg1 : i32, i32, i32
  }
  func.func @transform_1(%arg0: i32, %arg1: i32) -> (i32, i32) {
    %c0_i32 = arith.constant 0 : i32
    %c0_i32_0 = arith.constant 0 : i32
    %c0_i32_1 = arith.constant 0 : i32
    return %c0_i32, %c0_i32_0 : i32, i32
  }
  func.func @transform_2(%arg0: i32, %arg1: i32) -> i32 {
    %c0_i32 = arith.constant 0 : i32
    %c0_i32_0 = arith.constant 0 : i32
    return %c0_i32 : i32
  }
  func.func @transform_3(%arg0: i32, %arg1: i32) -> (i32, i32, i32) {
    %c0_i32 = arith.constant 0 : i32
    %c0_i32_0 = arith.constant 0 : i32
    return %arg0, %c0_i32, %arg1 : i32, i32, i32
  }
}

</mosaic_0001>

<llo_original>
// kernel: tpu_custom_call.1
$region0: #{tpu_custom_call.1}
  #allocation0 [shape = 'u32[]', space=smem, size = 0x4, offset = 0x4, fixed_abs, tag = 'smem constant byte address 0x4 - core index']
  #allocation1 [shape = 'u32[144,128]{1,0:T(1,128)}', space=vmem, size = 0x12000, scoped, tag = 'internal scratch']
  %s0 = inlined_call_operand.hbm [shape: u32[2,1,1024], index: 0, kind: input, shape index: {}]
  %s1 = inlined_call_operand.vmem [shape: f32[3,2], index: 1, kind: input, shape index: {}]
  %s2 = inlined_call_operand.vmem [shape: f32[3], index: 2, kind: input, shape index: {}]
  %s3 = inlined_call_operand.vmem [shape: f32[2,3,1024], index: 3, kind: output, shape index: {}]
  %s4 = sld [smem:[#allocation0]]
  $region57: #{tpu_custom_call.1} parent=0
    _
  %s6 = ssub.s32 1, %s4
  %s7 = scalar_select 0, %s6, %s4
  $region1: #{tpu_custom_call.1} parent=0
    #allocation2 [shape = 'u8[8192]{0}', space=vmem, size = 0x2000, scoped, tag = 'input window, operand 0']
    #allocation3 [shape = 's32[2]{0}', space=sflag, size = 0x8, scoped, tag = 'scoped memory for tpu_custom_call.1']
    #allocation4 [shape = 's32[2]{0}', space=sflag, size = 0x8, scoped, tag = 'scoped memory for tpu_custom_call.1']
    #allocation5 [shape = 'u8[2048]{0}', space=smem, size = 0x800, scoped, tag = 'input window, operand 1, single buffered']
    #allocation6 [shape = 'u8[512]{0}', space=smem, size = 0x200, scoped, tag = 'input window, operand 2, single buffered']
    #allocation7 [shape = 's32[1]{0}', space=sflag, size = 0x4, scoped, tag = 'scoped memory for tpu_custom_call.1']
    %8 = vsyncpa [#allocation3], 0
    %s9 = scalar_lea.sflag [#allocation3], 1
    %10 = vsyncpa %s9, 0
    %11 = vsyncpa [#allocation4], 0
    %12 = vsyncpa [#allocation7], 0
    loop: start=0, step=1, limit=4
    $region2: #{tpu_custom_call.1} parent=1 // loop_pre_header
      _
    $region3: #{tpu_custom_call.1} parent=1 // loop_header
      %s14 = sphi 0, %s18
      %p15 = scmp.ge.s32.totalorder %s14, 4
      %s21 = sphi 0, %s33
      %s22 = sphi 0, %s29
      %s23 = sphi 0, %s21
      %s24 = sphi 0, %s22
      %s25 = sphi 0, %s23
      %s26 = sphi 0, %s24
      %s38 = sphi 0, %s40
      %s41 = sphi 0, %s38
      %s42 = sphi 0, %s41
      %s58 = sphi 0, %s42
      %s62 = sphi 0, %s62
      %s64 = sphi 0, %s62
      %s65 = sphi 0, %s64
      %s79 = sphi 0, %s65
      %s83 = sphi 0, %s83
      %s85 = sphi 0, %s83
      %s86 = sphi 0, %s85
      %s100 = sphi 0, %s86
      %s108 = sphi 0, %s110
      %s111 = sphi 0, %s108
      %s112 = sphi 0, %s111
      %s128 = sphi 0, %s112
    $region4: #{tpu_custom_call.1} parent=1 // loop_header_branch
      %17 = sbr.rel (%p15) target = $region8
    $region5: #{tpu_custom_call.1} parent=1 // loop_body
      %s19 = ssub.s32 %s14, 1
      %s20 = ssub.s32 %s14, 2
      %s27 = sadd.s32 1, %s22
      %p28 = scmp.ge.s32.totalorder %s27, 1
      %s29 = scalar_select %p28, 0, %s27
      %s30 = sadd.s32 1, %s21
      %s31 = scalar_select %p28, %s30, %s21
      %p32 = scmp.ge.s32.totalorder %s31, 2
      %s33 = scalar_select %p32, 0, %s31
      %s34 = ssub.s32 %s21, %s33
      %s35 = ssub.s32 %s22, %s29
      %s36 = sor.u32 %s34, %s35
      %p37 = scmp.eq.s32.totalorder %s36, 0
      %s39 = sadd.s32 %s38, 1
      %s40 = scalar_select %p37, %s38, %s39
      %p43 = pneg %p37
      %p44 = scmp.eq.s32.totalorder %s14, 1
      %p45 = por %p43, %p44
      %p46 = scmp.ne.s32.totalorder %s38, %s41
      %p47 = scmp.eq.s32.totalorder %s14, 0
      %p48 = por %p46, %p47
      %p49 = scmp.ne.s32.totalorder %s38, %s41
      %p50 = scmp.eq.s32.totalorder %s19, 1
      %p51 = por %p49, %p50
      %p52 = scmp.ne.s32.totalorder %s41, %s42
      %p53 = scmp.eq.s32.totalorder %s19, 0
      %p54 = por %p52, %p53
      %p55 = scmp.ne.s32.totalorder %s41, %s42
      %p56 = scmp.eq.s32.totalorder %s20, 1
      %p57 = por %p55, %p56
      %p59 = scmp.ne.s32.totalorder %s42, %s58
      %p60 = scmp.eq.s32.totalorder %s20, 0
      %p61 = por %p59, %p60
      %s63 = sadd.s32 %s62, 1
      %p66 = scmp.eq.s32.totalorder %s14, 1
      %p67 = scmp.ne.s32.totalorder %s62, %s64
      %p68 = scmp.eq.s32.totalorder %s14, 0
      %p69 = por %p67, %p68
      %p70 = scmp.ne.s32.totalorder %s62, %s64
      %p71 = scmp.eq.s32.totalorder %s19, 1
      %p72 = por %p70, %p71
      %p73 = scmp.ne.s32.totalorder %s64, %s65
      %p74 = scmp.eq.s32.totalorder %s19, 0
      %p75 = por %p73, %p74
      %p76 = scmp.ne.s32.totalorder %s64, %s65
      %p77 = scmp.eq.s32.totalorder %s20, 1
      %p78 = por %p76, %p77
      %p80 = scmp.ne.s32.totalorder %s65, %s79
      %p81 = scmp.eq.s32.totalorder %s20, 0
      %p82 = por %p80, %p81
      %s84 = sadd.s32 %s83, 1
      %p87 = scmp.eq.s32.totalorder %s14, 1
      %p88 = scmp.ne.s32.totalorder %s83, %s85
      %p89 = scmp.eq.s32.totalorder %s14, 0
      %p90 = por %p88, %p89
      %p91 = scmp.ne.s32.totalorder %s83, %s85
      %p92 = scmp.eq.s32.totalorder %s19, 1
      %p93 = por %p91, %p92
      %p94 = scmp.ne.s32.totalorder %s85, %s86
      %p95 = scmp.eq.s32.totalorder %s19, 0
      %p96 = por %p94, %p95
      %p97 = scmp.ne.s32.totalorder %s85, %s86
      %p98 = scmp.eq.s32.totalorder %s20, 1
      %p99 = por %p97, %p98
      %p101 = scmp.ne.s32.totalorder %s86, %s100
      %p102 = scmp.eq.s32.totalorder %s20, 0
      %p103 = por %p101, %p102
      %s104 = ssub.s32 %s21, %s33
      %s105 = ssub.s32 %s22, %s29
      %s106 = sor.u32 %s104, %s105
      %p107 = scmp.eq.s32.totalorder %s106, 0
      %s109 = sadd.s32 %s108, 1
      %s110 = scalar_select %p107, %s108, %s109
      %p113 = pneg %p107
      %p114 = scmp.eq.s32.totalorder %s14, 1
      %p115 = por %p113, %p114
      %p116 = scmp.ne.s32.totalorder %s108, %s111
      %p117 = scmp.eq.s32.totalorder %s14, 0
      %p118 = por %p116, %p117
      %p119 = scmp.ne.s32.totalorder %s108, %s111
      %p120 = scmp.eq.s32.totalorder %s19, 1
      %p121 = por %p119, %p120
      %p122 = scmp.ne.s32.totalorder %s111, %s112
      %p123 = scmp.eq.s32.totalorder %s19, 0
      %p124 = por %p122, %p123
      %p125 = scmp.ne.s32.totalorder %s111, %s112
      %p126 = scmp.eq.s32.totalorder %s20, 1
      %p127 = por %p125, %p126
      %p129 = scmp.ne.s32.totalorder %s112, %s128
      %p130 = scmp.eq.s32.totalorder %s20, 0
      %p131 = por %p129, %p130
      %p132 = scmp.le.s32.totalorder 1, %s14
      %p133 = scmp.lt.s32.totalorder %s14, 3
      %p134 = pnand %p132, %p133
      %p135 = pneg %p134
      // Predicated region
      $region9: #{tpu_custom_call.1} parent=5 // pred_check
        _
      $region10: #{tpu_custom_call.1} parent=5 // pred_check_branch
        %137 = sbr.rel (%p134) target = $region12
      $region11: #{tpu_custom_call.1} parent=5 // pred_region
        %s138 = ssub.s32 %s14, 1
        // Predicated region
        $region13: #{tpu_custom_call.1} parent=11 // pred_check
          %p139 = pneg %p75
        $region14: #{tpu_custom_call.1} parent=11 // pred_check_branch
          %141 = sbr.rel (%p139) target = $region16
        $region15: #{tpu_custom_call.1} parent=11 // pred_region
          %s143 = ssub.s32 64, 64
          %144 = vsyncadd [#allocation4], %s143
          %s146 = sshll.u32 %s1, 4
          %s147 = int_to_ptr.vmem [resolvable:$true] %s146
          %149 = dma.vmem_to_smem %s147, 64, [#allocation5], [#allocation4]
        $region16: #{tpu_custom_call.1} parent=11 // pred_fallthru
          _
        // Predicated region
        $region17: #{tpu_custom_call.1} parent=11 // pred_check
          %p150 = pneg %p96
        $region18: #{tpu_custom_call.1} parent=11 // pred_check_branch
          %152 = sbr.rel (%p150) target = $region20
        $region19: #{tpu_custom_call.1} parent=11 // pred_region
          %s154 = ssub.s32 16, 16
          %155 = vsyncadd [#allocation7], %s154
          %s157 = sshll.u32 %s2, 4
          %s158 = int_to_ptr.vmem [resolvable:$true] %s157
          %160 = dma.vmem_to_smem %s158, 16, [#allocation6], [#allocation7]
        $region20: #{tpu_custom_call.1} parent=11 // pred_fallthru
          _
      $region12: #{tpu_custom_call.1} parent=5 // pred_fallthru
        _
      %p161 = scmp.lt.s32.totalorder %s14, 2
      // Predicated region
      $region21: #{tpu_custom_call.1} parent=5 // pred_check
        %p162 = pneg %p161
      $region22: #{tpu_custom_call.1} parent=5 // pred_check_branch
        %164 = sbr.rel (%p162) target = $region24
      $region23: #{tpu_custom_call.1} parent=5 // pred_region
        // Predicated region
        $region25: #{tpu_custom_call.1} parent=23 // pred_check
          %p165 = pneg %p48
        $region26: #{tpu_custom_call.1} parent=23 // pred_check_branch
          %167 = sbr.rel (%p165) target = $region28
        $region27: #{tpu_custom_call.1} parent=23 // pred_region
          %s168 = sand.u32 %s38, 1
          %s169 = scalar_lea.sflag [#allocation3], %s168
          %s170 = sand.u32 %s38, 1
          %s171 = smul.addr %s170, 8
          %s172 = scalar_lea.vmem [#allocation2], %s171
          %s173 = smul.u32 8, %s22
          %s175 = ssub.s32 128, 128
          %176 = vsyncadd %s169, %s175
          %s177 = smul.addr %s21, 8
          %s178 = sadd.s32 %s173, %s177
          %s179 = smul.addr %s178, 16
          %s180 = scalar_lea.hbm %s0, %s179
          %s182 = sshll.u32 %s172, 4
          %s183 = int_to_ptr.vmem [resolvable:$true] %s182
          %185 = dma.hbm_to_vmem [thread:$0]  %s180, 128, %s183, %s169
        $region28: #{tpu_custom_call.1} parent=23 // pred_fallthru
          _
      $region24: #{tpu_custom_call.1} parent=5 // pred_fallthru
        _
      %p186 = scmp.le.s32.totalorder 1, %s14
      %p187 = scmp.lt.s32.totalorder %s14, 3
      %p188 = pnand %p186, %p187
      %p189 = pneg %p188
      // Predicated region
      $region29: #{tpu_custom_call.1} parent=5 // pred_check
        _
      $region30: #{tpu_custom_call.1} parent=5 // pred_check_branch
        %191 = sbr.rel (%p188) target = $region32
      $region31: #{tpu_custom_call.1} parent=5 // pred_region
        %s192 = ssub.s32 %s14, 1
        %s193 = sand.u32 %s41, 1
        %s194 = scalar_lea.sflag [#allocation3], %s193
        %s195 = sand.u32 %s41, 1
        %s196 = smul.addr %s195, 8
        %s197 = scalar_lea.vmem [#allocation2], %s196
        // Predicated region
        $region33: #{tpu_custom_call.1} parent=31 // pred_check
          %p198 = pneg %p54
        $region34: #{tpu_custom_call.1} parent=31 // pred_check_branch
          %200 = sbr.rel (%p198) target = $region36
        $region35: #{tpu_custom_call.1} parent=31 // pred_region
          %201 = dma.done %s194, 128
        $region36: #{tpu_custom_call.1} parent=31 // pred_fallthru
          _
        // Predicated region
        $region37: #{tpu_custom_call.1} parent=31 // pred_check
          %p202 = pneg %p75
        $region38: #{tpu_custom_call.1} parent=31 // pred_check_branch
          %204 = sbr.rel (%p202) target = $region40
        $region39: #{tpu_custom_call.1} parent=31 // pred_region
          %205 = dma.done [#allocation4], 64
        $region40: #{tpu_custom_call.1} parent=31 // pred_fallthru
          _
        // Predicated region
        $region41: #{tpu_custom_call.1} parent=31 // pred_check
          %p206 = pneg %p96
        $region42: #{tpu_custom_call.1} parent=31 // pred_check_branch
          %208 = sbr.rel (%p206) target = $region44
        $region43: #{tpu_custom_call.1} parent=31 // pred_region
          %209 = dma.done [#allocation7], 16
        $region44: #{tpu_custom_call.1} parent=31 // pred_fallthru
          _
        %210 = sfence
        %s211 = sand.u32 %s41, 1
        %s212 = scalar_lea.sflag [#allocation3], %s211
        %s213 = sand.u32 %s41, 1
        %s214 = smul.addr %s213, 8
        %s215 = scalar_lea.vmem [#allocation2], %s214
        %p216 = pneg %p54
        %p217 = pneg %p51
        %p218 = pneg %p75
        %p219 = pneg %p72
        %p220 = pneg %p96
        %p221 = pneg %p93
        %p222 = pneg %p124
        %p223 = pneg %p121
        %s224 = smul.u32 8, %s24
        %p225 = scmp.lt.s32.totalorder %s23, 1
        %s226 = scalar_select %p225, %s23, 1
        %p227 = scmp.lt.s32.totalorder %s224, 7
        %s228 = scalar_select %p227, %s224, 7
        %s229 = smul.addr %s226, 8
        %s230 = sadd.s32 %s228, %s229
        %s231 = smul.addr %s230, 4
        %s232 = scalar_lea.vmem %s3, %s231
        %s233 = smul.u32 8, %s24
        %s234 = smul.u32 8, %s24
        %p235 = scmp.lt.s32.totalorder %s23, 1
        %s236 = scalar_select %p235, %s23, 1
        %p237 = scmp.lt.s32.totalorder %s234, 7
        %s238 = scalar_select %p237, %s234, 7
        %s239 = smul.addr %s236, 8
        %s240 = sadd.s32 %s238, %s239
        %s241 = smul.addr %s240, 4
        %s242 = scalar_lea.vmem %s3, %s241
        %s243 = smul.u32 8, %s24
        %v244 = vld [vmem:[%s197] sm:$0xff]
        %v245 = vshll.u32 %v244, 16
        %v246 = vlaneseq
        %v247 = vshrl.u32 %v246, 7
        %v248 = vsub.s32 0, %v247
        %v249 = vrot.slane %v245, %v248
        %v250 = vlaneseq
        %v251 = vshrl.u32 %v250, 7
        %v252 = vsub.s32 1, %v251
        %v253 = vrot.slane %v245, %v252
        %v254 = vlaneseq
        %v255 = vshrl.u32 %v254, 7
        %v256 = vsub.s32 2, %v255
        %v257 = vrot.slane %v245, %v256
        %v258 = vlaneseq
        %v259 = vshrl.u32 %v258, 7
        %v260 = vsub.s32 3, %v259
        %v261 = vrot.slane %v245, %v260
        %v262 = vlaneseq
        %v263 = vshrl.u32 %v262, 7
        %v264 = vsub.s32 4, %v263
        %v265 = vrot.slane %v245, %v264
        %v266 = vlaneseq
        %v267 = vshrl.u32 %v266, 7
        %v268 = vsub.s32 5, %v267
        %v269 = vrot.slane %v245, %v268
        %v270 = vlaneseq
        %v271 = vshrl.u32 %v270, 7
        %v272 = vsub.s32 6, %v271
        %v273 = vrot.slane %v245, %v272
        %v274 = vlaneseq
        %v275 = vshrl.u32 %v274, 7
        %v276 = vsub.s32 7, %v275
        %v277 = vrot.slane %v245, %v276
        %v286 = vand.u32 %v244, 4294901760
        %v287 = vlaneseq
        %v288 = vshrl.u32 %v287, 7
        %v289 = vsub.s32 0, %v288
        %v290 = vrot.slane %v286, %v289
        %v291 = vlaneseq
        %v292 = vshrl.u32 %v291, 7
        %v293 = vsub.s32 1, %v292
        %v294 = vrot.slane %v286, %v293
        %v295 = vlaneseq
        %v296 = vshrl.u32 %v295, 7
        %v297 = vsub.s32 2, %v296
        %v298 = vrot.slane %v286, %v297
        %v299 = vlaneseq
        %v300 = vshrl.u32 %v299, 7
        %v301 = vsub.s32 3, %v300
        %v302 = vrot.slane %v286, %v301
        %v303 = vlaneseq
        %v304 = vshrl.u32 %v303, 7
        %v305 = vsub.s32 4, %v304
        %v306 = vrot.slane %v286, %v305
        %v307 = vlaneseq
        %v308 = vshrl.u32 %v307, 7
        %v309 = vsub.s32 5, %v308
        %v310 = vrot.slane %v286, %v309
        %v311 = vlaneseq
        %v312 = vshrl.u32 %v311, 7
        %v313 = vsub.s32 6, %v312
        %v314 = vrot.slane %v286, %v313
        %v315 = vlaneseq
        %v316 = vshrl.u32 %v315, 7
        %v317 = vsub.s32 7, %v316
        %v318 = vrot.slane %v286, %v317
        %s327 = sld [smem:[#allocation5]]
        %v328 = vstv %s327
        %v329 = vmul.f32 %v328, %v249
        %v330 = vmul.f32 %v328, %v253
        %v331 = vmul.f32 %v328, %v257
        %v332 = vmul.f32 %v328, %v261
        %v333 = vmul.f32 %v328, %v265
        %v334 = vmul.f32 %v328, %v269
        %v335 = vmul.f32 %v328, %v273
        %v336 = vmul.f32 %v328, %v277
        %s337 = sld [smem:[#allocation5 + $0x1]]
        %v338 = vstv %s337
        %v339 = vmul.f32 %v338, %v290
        %v340 = vmul.f32 %v338, %v294
        %v341 = vmul.f32 %v338, %v298
        %v342 = vmul.f32 %v338, %v302
        %v343 = vmul.f32 %v338, %v306
        %v344 = vmul.f32 %v338, %v310
        %v345 = vmul.f32 %v338, %v314
        %v346 = vmul.f32 %v338, %v318
        %v347 = vadd.f32 %v329, %v339
        %v348 = vadd.f32 %v330, %v340
        %v349 = vadd.f32 %v331, %v341
        %v350 = vadd.f32 %v332, %v342
        %v351 = vadd.f32 %v333, %v343
        %v352 = vadd.f32 %v334, %v344
        %v353 = vadd.f32 %v335, %v345
        %v354 = vadd.f32 %v336, %v346
        %s355 = sld [smem:[#allocation6]]
        %v356 = vstv %s355
        %v357 = vadd.f32 %v347, %v356
        %v358 = vadd.f32 %v348, %v356
        %v359 = vadd.f32 %v349, %v356
        %v360 = vadd.f32 %v350, %v356
        %v361 = vadd.f32 %v351, %v356
        %v362 = vadd.f32 %v352, %v356
        %v363 = vadd.f32 %v353, %v356
        %v364 = vadd.f32 %v354, %v356
        %v373 = vcombine.low %v357, %v358
        %v374 = vcombine.low %v359, %v360
        %v375 = vcombine.low %v361, %v362
        %v376 = vcombine.low %v363, %v364
        %v378 = vunpack.c.l.s4 1966171168
        %v379 = vunpack.c.0.s8 %v378
        %v380 = vlaneseq
        %v381 = vshrl.u32 %v380, 7
        %v382 = vsub.s32 %v379, %v381
        %v383 = vrot.slane %v373, %v382
        %v385 = vunpack.c.l.s4 1966171168
        %v386 = vunpack.c.0.s8 %v385
        %v387 = vlaneseq
        %v388 = vshrl.u32 %v387, 7
        %v389 = vsub.s32 %v386, %v388
        %v390 = vrot.slane %v374, %v389
        %v392 = vunpack.c.l.s4 1966171168
        %v393 = vunpack.c.0.s8 %v392
        %v394 = vlaneseq
        %v395 = vshrl.u32 %v394, 7
        %v396 = vsub.s32 %v393, %v395
        %v397 = vrot.slane %v375, %v396
        %v399 = vunpack.c.l.s4 1966171168
        %v400 = vunpack.c.0.s8 %v399
        %v401 = vlaneseq
        %v402 = vshrl.u32 %v401, 7
        %v403 = vsub.s32 %v400, %v402
        %v404 = vrot.slane %v376, %v403
        %v405 = vcombine.low %v383, %v390
        %v406 = vcombine.low %v397, %v404
        %v408 = vunpack.c.l.s4 1966171168
        %v409 = vunpack.c.0.s8 %v408
        %v410 = vlaneseq
        %v411 = vshrl.u32 %v410, 7
        %v412 = vsub.s32 %v409, %v411
        %v413 = vrot.slane %v405, %v412
        %v415 = vunpack.c.l.s4 1966171168
        %v416 = vunpack.c.0.s8 %v415
        %v417 = vlaneseq
        %v418 = vshrl.u32 %v417, 7
        %v419 = vsub.s32 %v416, %v418
        %v420 = vrot.slane %v406, %v419
        %v421 = vcombine.low %v413, %v420
        %423 = vst [vmem:[%s242] ss:$4 sm:$0xff] %v421
        %s424 = sld [smem:[#allocation5 + $0x80]]
        %v425 = vstv %s424
        %v426 = vmul.f32 %v425, %v249
        %v427 = vmul.f32 %v425, %v253
        %v428 = vmul.f32 %v425, %v257
        %v429 = vmul.f32 %v425, %v261
        %v430 = vmul.f32 %v425, %v265
        %v431 = vmul.f32 %v425, %v269
        %v432 = vmul.f32 %v425, %v273
        %v433 = vmul.f32 %v425, %v277
        %s434 = sld [smem:[#allocation5 + $0x81]]
        %v435 = vstv %s434
        %v436 = vmul.f32 %v435, %v290
        %v437 = vmul.f32 %v435, %v294
        %v438 = vmul.f32 %v435, %v298
        %v439 = vmul.f32 %v435, %v302
        %v440 = vmul.f32 %v435, %v306
        %v441 = vmul.f32 %v435, %v310
        %v442 = vmul.f32 %v435, %v314
        %v443 = vmul.f32 %v435, %v318
        %v444 = vadd.f32 %v426, %v436
        %v445 = vadd.f32 %v427, %v437
        %v446 = vadd.f32 %v428, %v438
        %v447 = vadd.f32 %v429, %v439
        %v448 = vadd.f32 %v430, %v440
        %v449 = vadd.f32 %v431, %v441
        %v450 = vadd.f32 %v432, %v442
        %v451 = vadd.f32 %v433, %v443
        %s452 = sld [smem:[#allocation6 + $0x1]]
        %v453 = vstv %s452
        %v454 = vadd.f32 %v444, %v453
        %v455 = vadd.f32 %v445, %v453
        %v456 = vadd.f32 %v446, %v453
        %v457 = vadd.f32 %v447, %v453
        %v458 = vadd.f32 %v448, %v453
        %v459 = vadd.f32 %v449, %v453
        %v460 = vadd.f32 %v450, %v453
        %v461 = vadd.f32 %v451, %v453
        %v470 = vcombine.low %v454, %v455
        %v471 = vcombine.low %v456, %v457
        %v472 = vcombine.low %v458, %v459
        %v473 = vcombine.low %v460, %v461
        %v475 = vunpack.c.l.s4 1966171168
        %v476 = vunpack.c.0.s8 %v475
        %v477 = vlaneseq
        %v478 = vshrl.u32 %v477, 7
        %v479 = vsub.s32 %v476, %v478
        %v480 = vrot.slane %v470, %v479
        %v482 = vunpack.c.l.s4 1966171168
        %v483 = vunpack.c.0.s8 %v482
        %v484 = vlaneseq
        %v485 = vshrl.u32 %v484, 7
        %v486 = vsub.s32 %v483, %v485
        %v487 = vrot.slane %v471, %v486
        %v489 = vunpack.c.l.s4 1966171168
        %v490 = vunpack.c.0.s8 %v489
        %v491 = vlaneseq
        %v492 = vshrl.u32 %v491, 7
        %v493 = vsub.s32 %v490, %v492
        %v494 = vrot.slane %v472, %v493
        %v496 = vunpack.c.l.s4 1966171168
        %v497 = vunpack.c.0.s8 %v496
        %v498 = vlaneseq
        %v499 = vshrl.u32 %v498, 7
        %v500 = vsub.s32 %v497, %v499
        %v501 = vrot.slane %v473, %v500
        %v502 = vcombine.low %v480, %v487
        %v503 = vcombine.low %v494, %v501
        %v505 = vunpack.c.l.s4 1966171168
        %v506 = vunpack.c.0.s8 %v505
        %v507 = vlaneseq
        %v508 = vshrl.u32 %v507, 7
        %v509 = vsub.s32 %v506, %v508
        %v510 = vrot.slane %v502, %v509
        %v512 = vunpack.c.l.s4 1966171168
        %v513 = vunpack.c.0.s8 %v512
        %v514 = vlaneseq
        %v515 = vshrl.u32 %v514, 7
        %v516 = vsub.s32 %v513, %v515
        %v517 = vrot.slane %v503, %v516
        %v518 = vcombine.low %v510, %v517
        %s520 = scalar_lea.vmem %s242, 1
        %521 = vst [vmem:[%s520] ss:$4 sm:$0xff] %v518
        %s522 = sld [smem:[#allocation5 + $0x100]]
        %v523 = vstv %s522
        %v524 = vmul.f32 %v523, %v249
        %v525 = vmul.f32 %v523, %v253
        %v526 = vmul.f32 %v523, %v257
        %v527 = vmul.f32 %v523, %v261
        %v528 = vmul.f32 %v523, %v265
        %v529 = vmul.f32 %v523, %v269
        %v530 = vmul.f32 %v523, %v273
        %v531 = vmul.f32 %v523, %v277
        %s532 = sld [smem:[#allocation5 + $0x101]]
        %v533 = vstv %s532
        %v534 = vmul.f32 %v533, %v290
        %v535 = vmul.f32 %v533, %v294
        %v536 = vmul.f32 %v533, %v298
        %v537 = vmul.f32 %v533, %v302
        %v538 = vmul.f32 %v533, %v306
        %v539 = vmul.f32 %v533, %v310
        %v540 = vmul.f32 %v533, %v314
        %v541 = vmul.f32 %v533, %v318
        %v542 = vadd.f32 %v524, %v534
        %v543 = vadd.f32 %v525, %v535
        %v544 = vadd.f32 %v526, %v536
        %v545 = vadd.f32 %v527, %v537
        %v546 = vadd.f32 %v528, %v538
        %v547 = vadd.f32 %v529, %v539
        %v548 = vadd.f32 %v530, %v540
        %v549 = vadd.f32 %v531, %v541
        %s550 = sld [smem:[#allocation6 + $0x2]]
        %v551 = vstv %s550
        %v552 = vadd.f32 %v542, %v551
        %v553 = vadd.f32 %v543, %v551
        %v554 = vadd.f32 %v544, %v551
        %v555 = vadd.f32 %v545, %v551
        %v556 = vadd.f32 %v546, %v551
        %v557 = vadd.f32 %v547, %v551
        %v558 = vadd.f32 %v548, %v551
        %v559 = vadd.f32 %v549, %v551
        %v568 = vcombine.low %v552, %v553
        %v569 = vcombine.low %v554, %v555
        %v570 = vcombine.low %v556, %v557
        %v571 = vcombine.low %v558, %v559
        %v573 = vunpack.c.l.s4 1966171168
        %v574 = vunpack.c.0.s8 %v573
        %v575 = vlaneseq
        %v576 = vshrl.u32 %v575, 7
        %v577 = vsub.s32 %v574, %v576
        %v578 = vrot.slane %v568, %v577
        %v580 = vunpack.c.l.s4 1966171168
        %v581 = vunpack.c.0.s8 %v580
        %v582 = vlaneseq
        %v583 = vshrl.u32 %v582, 7
        %v584 = vsub.s32 %v581, %v583
        %v585 = vrot.slane %v569, %v584
        %v587 = vunpack.c.l.s4 1966171168
        %v588 = vunpack.c.0.s8 %v587
        %v589 = vlaneseq
        %v590 = vshrl.u32 %v589, 7
        %v591 = vsub.s32 %v588, %v590
        %v592 = vrot.slane %v570, %v591
        %v594 = vunpack.c.l.s4 1966171168
        %v595 = vunpack.c.0.s8 %v594
        %v596 = vlaneseq
        %v597 = vshrl.u32 %v596, 7
        %v598 = vsub.s32 %v595, %v597
        %v599 = vrot.slane %v571, %v598
        %v600 = vcombine.low %v578, %v585
        %v601 = vcombine.low %v592, %v599
        %v603 = vunpack.c.l.s4 1966171168
        %v604 = vunpack.c.0.s8 %v603
        %v605 = vlaneseq
        %v606 = vshrl.u32 %v605, 7
        %v607 = vsub.s32 %v604, %v606
        %v608 = vrot.slane %v600, %v607
        %v610 = vunpack.c.l.s4 1966171168
        %v611 = vunpack.c.0.s8 %v610
        %v612 = vlaneseq
        %v613 = vshrl.u32 %v612, 7
        %v614 = vsub.s32 %v611, %v613
        %v615 = vrot.slane %v601, %v614
        %v616 = vcombine.low %v608, %v615
        %s618 = scalar_lea.vmem %s242, 2
        %619 = vst [vmem:[%s618] ss:$4 sm:$0xff] %v616
        %s620 = smul.u32 8, %s24
        %p621 = scmp.lt.s32.totalorder %s23, 1
        %s622 = scalar_select %p621, %s23, 1
        %p623 = scmp.lt.s32.totalorder %s620, 7
        %s624 = scalar_select %p623, %s620, 7
        %s625 = smul.addr %s622, 8
        %s626 = sadd.s32 %s624, %s625
        %s627 = smul.addr %s626, 4
        %s628 = scalar_lea.vmem %s3, %s627
        // Predicated region
        $region45: #{tpu_custom_call.1} parent=31 // pred_check
          %p629 = pneg %p121
        $region46: #{tpu_custom_call.1} parent=31 // pred_check_branch
          %631 = sbr.rel (%p629) target = $region48
        $region47: #{tpu_custom_call.1} parent=31 // pred_region
          %s632 = smul.u32 8, %s24
        $region48: #{tpu_custom_call.1} parent=31 // pred_fallthru
          _
      $region32: #{tpu_custom_call.1} parent=5 // pred_fallthru
        _
      %p633 = scmp.le.s32.totalorder 2, %s14
      // Predicated region
      $region49: #{tpu_custom_call.1} parent=5 // pred_check
        %p634 = pneg %p633
      $region50: #{tpu_custom_call.1} parent=5 // pred_check_branch
        %636 = sbr.rel (%p634) target = $region52
      $region51: #{tpu_custom_call.1} parent=5 // pred_region
        %s637 = ssub.s32 %s14, 2
        // Predicated region
        $region53: #{tpu_custom_call.1} parent=51 // pred_check
          %p638 = pneg %p127
        $region54: #{tpu_custom_call.1} parent=51 // pred_check_branch
          %640 = sbr.rel (%p638) target = $region56
        $region55: #{tpu_custom_call.1} parent=51 // pred_region
          %s641 = smul.u32 8, %s26
          %p642 = scmp.lt.s32.totalorder %s25, 1
          %s643 = scalar_select %p642, %s25, 1
          %p644 = scmp.lt.s32.totalorder %s641, 7
          %s645 = scalar_select %p644, %s641, 7
          %s646 = smul.addr %s643, 8
          %s647 = sadd.s32 %s645, %s646
          %s648 = smul.addr %s647, 4
          %s649 = scalar_lea.vmem %s3, %s648
        $region56: #{tpu_custom_call.1} parent=51 // pred_fallthru
          _
      $region52: #{tpu_custom_call.1} parent=5 // pred_fallthru
        _
    $region6: #{tpu_custom_call.1} parent=1 // loop_footer
      %s18 = sadd.s32 1, %s14
    $region7: #{tpu_custom_call.1} parent=1 // loop_footer_branch
      %13 = sbr.rel target = $region3
    $region8: #{tpu_custom_call.1} parent=1 // loop_exit
      _
    %650 = vsyncpa [#allocation3], 1
    %s651 = scalar_lea.sflag [#allocation3], 1
    %652 = vsyncpa %s651, 1
    %653 = vsyncpa [#allocation4], 1
    %s654 = scalar_lea.sflag [#allocation4], 1
    %655 = vsyncpa %s654, 1
    %656 = vsyncpa [#allocation7], 1

</llo_original>
